<compile_context>
chip_gen: v5e
topology: v5e:2x2
jax: 0.10.0
libtpu: 0.0.40
codegen_flags: <defaults>
</compile_context>

<pallas_src>
import jax
import jax.numpy as jnp
from jax.experimental import pallas as pl
from jax.experimental.pallas import tpu as pltpu

_LANE = 128
_BF16_PACK = 16           # bf16 sublane packing: keep batch tiles 16-aligned
_VMEM_CAP = 48 << 20      # safe on v7x (64 MiB physical VMEM)


def _round_up(x, m):
    return ((x + m - 1) // m) * m


def _has_bf16_vpu():
    """bf16 VALUs exist on v6e/v7x; v5e and older do elementwise in f32."""
    try:
        kind = jax.devices()[0].device_kind.lower()
    except Exception:  # no device info -> conservative f32 epilogue
        return False
    return any(tag in kind for tag in ("v6", "v7", "7x"))


def _make_kernel(act_bf16):
    """Fused 4-layer MLP over one batch tile. bf16 MXU inputs, f32 accumulate."""
    act_dtype = jnp.bfloat16 if act_bf16 else jnp.float32

    def _hidden(acc_f32, b_ref):
        # bias-add + ReLU epilogue; bf16 on v6e/v7x, f32 on v5e.
        h = acc_f32.astype(act_dtype) if act_bf16 else acc_f32
        h = jnp.maximum(h + b_ref[...], 0.0)
        return h if act_bf16 else h.astype(jnp.bfloat16)

    def kernel(x_ref,
               w0_ref, b0_ref,
               w1_ref, b1_ref,
               w2_ref, b2_ref,
               w3_ref, b3_ref,
               out_ref):
        # Layer 0: concat already folded into the padded input / padded W0 rows.
        h = jnp.dot(x_ref[...], w0_ref[...], preferred_element_type=jnp.float32)
        h = _hidden(h, b0_ref)

        h = jnp.dot(h, w1_ref[...], preferred_element_type=jnp.float32)
        h = _hidden(h, b1_ref)

        h = jnp.dot(h, w2_ref[...], preferred_element_type=jnp.float32)
        h = _hidden(h, b2_ref)

        q = jnp.dot(h, w3_ref[...], preferred_element_type=jnp.float32)
        out_ref[...] = (q + b3_ref[...]).astype(out_ref.dtype)

    return kernel


def _build_call(batch_pad, batch_tile, k_pad, hidden, a_pad, act_bf16):
    """Build the pallas_call for the given (static) shapes."""

    def resident(shape):
        # Weights / biases: constant index map -> VMEM-resident across the grid.
        return pl.BlockSpec(shape, lambda i: (0, 0))

    grid = (batch_pad // batch_tile,)

    # VMEM budget from actual usage (double-buffered weights + io tiles).
    b_dtype_bytes = 2 if act_bf16 else 4
    w_bytes = (k_pad * hidden + 2 * hidden * hidden + hidden * a_pad) * 2
    b_bytes = 3 * hidden * b_dtype_bytes + a_pad * 4
    io_bytes = batch_tile * k_pad * 2 + batch_tile * a_pad * 4
    interm_bytes = 2 * batch_tile * hidden * (2 if act_bf16 else 4)
    needed = 2 * (w_bytes + b_bytes) + 2 * io_bytes + interm_bytes
    vmem_limit = min(int(1.5 * needed) + (4 << 20), _VMEM_CAP)

    return pl.pallas_call(
        _make_kernel(act_bf16),
        out_shape=jax.ShapeDtypeStruct((batch_pad, a_pad), jnp.float32),
        grid_spec=pltpu.PrefetchScalarGridSpec(
            num_scalar_prefetch=0,
            grid=grid,
            in_specs=[
                pl.BlockSpec((batch_tile, k_pad), lambda i: (i, 0)),  # x tile
                resident((k_pad, hidden)), resident((1, hidden)),     # W0, b0
                resident((hidden, hidden)), resident((1, hidden)),    # W1, b1
                resident((hidden, hidden)), resident((1, hidden)),    # W2, b2
                resident((hidden, a_pad)), resident((1, a_pad)),      # W3, b3
            ],
            out_specs=pl.BlockSpec((batch_tile, a_pad), lambda i: (i, 0)),
        ),
        compiler_params=pltpu.CompilerParams(
            # Pure batch parallelism; with >1 grid step this can be sharded
            # across v7x's two TensorCores.
            dimension_semantics=("parallel",),
            vmem_limit_bytes=vmem_limit,
        ),
    )


def waterworld_crm_dqn_forward(obs, aut_one_hot, params, *, batch_tile=None):
    """Pallas implementation of WaterWorldCRMDQN.forward(obs, automaton_one_hot).

    params: four (W, b) pairs with W stored as (in_features, out_features),
            i.e. the transpose of torch.nn.Linear.weight.
    """
    (w0, b0), (w1, b1), (w2, b2), (w3, b3) = params

    B, obs_dim = obs.shape
    n_aut = aut_one_hot.shape[1]
    K = obs_dim + n_aut
    H = w0.shape[1]
    A = w3.shape[1]
    assert w0.shape[0] == K

    act_bf16 = _has_bf16_vpu()

    # --- batch tiling: 16-aligned tiles; single grid step unless each step
    #     gets a few hundred rows (otherwise overhead / weight re-fetch wins). --
    if batch_tile is None:
        b16 = _round_up(B, _BF16_PACK)
        if b16 <= 512:
            batch_tile = b16                                # grid = (1,)
        elif b16 <= 1024:
            batch_tile = _round_up(pl.cdiv(b16, 2), _LANE)  # 2 big steps
        else:
            batch_tile = 512
    batch_tile = _round_up(batch_tile, _BF16_PACK)
    B_pad = _round_up(B, batch_tile)

    # --- layout / dtype prep (tiny, once per call) ---
    # Fold the concat into a single K-padded layer-0 matmul.
    K_pad = _round_up(K, _LANE)
    x = jnp.concatenate([obs, aut_one_hot], axis=1).astype(jnp.bfloat16)
    x = jnp.pad(x, ((0, B_pad - B), (0, K_pad - K)))

    w0p = jnp.zeros((K_pad, H), jnp.bfloat16).at[:K].set(w0.astype(jnp.bfloat16))
    w1c = w1.astype(jnp.bfloat16)
    w2c = w2.astype(jnp.bfloat16)

    # Pad the action dim up to a full 128-lane width -> unmasked dense stores.
    A_pad = _round_up(A, _LANE)
    w3p = jnp.zeros((H, A_pad), jnp.bfloat16).at[:, :A].set(w3.astype(jnp.bfloat16))
    b3p = jnp.zeros((1, A_pad), jnp.float32).at[:, :A].set(b3.astype(jnp.float32))

    b_dtype = jnp.bfloat16 if act_bf16 else jnp.float32
    b0r = b0.astype(b_dtype).reshape(1, -1)
    b1r = b1.astype(b_dtype).reshape(1, -1)
    b2r = b2.astype(b_dtype).reshape(1, -1)

    out = _build_call(B_pad, batch_tile, K_pad, H, A_pad, act_bf16)(
        x, w0p, b0r, w1c, b1r, w2c, b2r, w3p, b3p)

    return out[:B, :A]


def init_params(key, obs_dim, num_automaton_states, num_actions, layer_size):
    """Deterministic parameter init (shapes match the PyTorch module)."""
    in_dim = obs_dim + num_automaton_states
    dims = [in_dim, layer_size, layer_size, layer_size, num_actions]
    params = []
    for d_in, d_out in zip(dims[:-1], dims[1:]):
        key, kw, kb = jax.random.split(key, 3)
        bound = 1.0 / jnp.sqrt(jnp.float32(d_in))
        # Stored as (in, out) == W^T of torch's nn.Linear weight (out, in).
        w = jax.random.uniform(kw, (d_in, d_out), jnp.float32, -bound, bound)
        b = jax.random.uniform(kb, (d_out,), jnp.float32, -bound, bound)
        params.append((w, b))
    return params


def reference_forward(obs, aut_one_hot, params):
    x = jnp.concatenate([obs, aut_one_hot], axis=1).astype(jnp.float32)
    for i, (w, b) in enumerate(params):
        x = x @ w + b
        if i < len(params) - 1:
            x = jnp.maximum(x, 0.0)
    return x


if __name__ == "__main__":
    # Small, WaterWorld-like shapes. batch=20 exercises batch padding
    # (tile = 32, single grid step).
    batch = 20
    obs_dim = 52                 # obs_shape[0]
    num_automaton_states = 4
    num_actions = 5
    layer_size = 128             # module default is 512; smaller for the demo

    key = jax.random.PRNGKey(0)
    key, k_obs, k_aut, k_par = jax.random.split(key, 4)

    obs = jax.random.normal(k_obs, (batch, obs_dim), jnp.float32)
    aut_idx = jax.random.randint(k_aut, (batch,), 0, num_automaton_states)
    aut_one_hot = jax.nn.one_hot(aut_idx, num_automaton_states,
                                 dtype=jnp.float32)

    params = init_params(k_par, obs_dim, num_automaton_states,
                         num_actions, layer_size)

    q = waterworld_crm_dqn_forward(obs, aut_one_hot, params)
    q = jax.block_until_ready(q)

    q_ref = reference_forward(obs, aut_one_hot, params)
    assert q.shape == (batch, num_actions), q.shape
    # bf16 matmul inputs + f32 accumulation vs. an all-f32 reference.
    max_err = float(jnp.max(jnp.abs(q - q_ref)))
    assert jnp.allclose(q, q_ref, atol=5e-2, rtol=5e-2), max_err

    print("KERNEL_OK")
</pallas_src>

<mosaic_0001>
module attributes {stable_mosaic.version = 11 : i64} {
  func.func @kernel(%arg0: i32, %arg1: memref<32x128xbf16, #tpu.memory_space<vmem>>, %arg2: memref<128x128xbf16, #tpu.memory_space<vmem>>, %arg3: memref<1x128xf32, #tpu.memory_space<vmem>>, %arg4: memref<128x128xbf16, #tpu.memory_space<vmem>>, %arg5: memref<1x128xf32, #tpu.memory_space<vmem>>, %arg6: memref<128x128xbf16, #tpu.memory_space<vmem>>, %arg7: memref<1x128xf32, #tpu.memory_space<vmem>>, %arg8: memref<128x128xbf16, #tpu.memory_space<vmem>>, %arg9: memref<1x128xf32, #tpu.memory_space<vmem>>, %arg10: memref<32x128xf32, #tpu.memory_space<vmem>>) attributes {dimension_semantics = [#tpu.dimension_semantics<parallel>], iteration_bounds = array<i64: 1>, scalar_prefetch = 0 : i64, scratch_operands = 0 : i64, tpu.core_type = #tpu.core_type<tc>, window_params = [{transform_indices = @transform_0, window_bounds = array<i64: 32, 128>}, {pipeline_mode = #tpu.pipeline_mode<synchronous>, transform_indices = @transform_1, window_bounds = array<i64: 128, 128>}, {pipeline_mode = #tpu.pipeline_mode<synchronous>, transform_indices = @transform_2, window_bounds = array<i64: 1, 128>}, {pipeline_mode = #tpu.pipeline_mode<synchronous>, transform_indices = @transform_3, window_bounds = array<i64: 128, 128>}, {pipeline_mode = #tpu.pipeline_mode<synchronous>, transform_indices = @transform_4, window_bounds = array<i64: 1, 128>}, {pipeline_mode = #tpu.pipeline_mode<synchronous>, transform_indices = @transform_5, window_bounds = array<i64: 128, 128>}, {pipeline_mode = #tpu.pipeline_mode<synchronous>, transform_indices = @transform_6, window_bounds = array<i64: 1, 128>}, {pipeline_mode = #tpu.pipeline_mode<synchronous>, transform_indices = @transform_7, window_bounds = array<i64: 128, 128>}, {pipeline_mode = #tpu.pipeline_mode<synchronous>, transform_indices = @transform_8, window_bounds = array<i64: 1, 128>}, {transform_indices = @transform_9, window_bounds = array<i64: 32, 128>}]} {
    %c0 = arith.constant 0 : index
    %c0_0 = arith.constant 0 : index
    %0 = vector.load %arg1[%c0, %c0_0] : memref<32x128xbf16, #tpu.memory_space<vmem>>, vector<32x128xbf16>
    %c0_1 = arith.constant 0 : index
    %c0_2 = arith.constant 0 : index
    %1 = vector.load %arg2[%c0_1, %c0_2] : memref<128x128xbf16, #tpu.memory_space<vmem>>, vector<128x128xbf16>
    %cst = arith.constant dense<0.000000e+00> : vector<32x128xf32>
    %2 = tpu.matmul %0, %1, %cst {dimension_numbers = #tpu.dot_dimension_numbers<[1], [0], [0], [1], [0, 0, 1, 1], [], []>} : vector<32x128xbf16>, vector<128x128xbf16>, vector<32x128xf32> -> vector<32x128xf32>
    %c0_3 = arith.constant 0 : index
    %c0_4 = arith.constant 0 : index
    %3 = vector.load %arg3[%c0_3, %c0_4] : memref<1x128xf32, #tpu.memory_space<vmem>>, vector<1x128xf32>
    %4 = vector.broadcast %3 : vector<1x128xf32> to vector<32x128xf32>
    %5 = arith.addf %2, %4 : vector<32x128xf32>
    %cst_5 = arith.constant 0.000000e+00 : f32
    %6 = vector.broadcast %cst_5 : f32 to vector<32x128xf32>
    %7 = arith.maximumf %5, %6 : vector<32x128xf32>
    %8 = arith.truncf %7 : vector<32x128xf32> to vector<32x128xbf16>
    %c0_6 = arith.constant 0 : index
    %c0_7 = arith.constant 0 : index
    %9 = vector.load %arg4[%c0_6, %c0_7] : memref<128x128xbf16, #tpu.memory_space<vmem>>, vector<128x128xbf16>
    %cst_8 = arith.constant dense<0.000000e+00> : vector<32x128xf32>
    %10 = tpu.matmul %8, %9, %cst_8 {dimension_numbers = #tpu.dot_dimension_numbers<[1], [0], [0], [1], [0, 0, 1, 1], [], []>} : vector<32x128xbf16>, vector<128x128xbf16>, vector<32x128xf32> -> vector<32x128xf32>
    %c0_9 = arith.constant 0 : index
    %c0_10 = arith.constant 0 : index
    %11 = vector.load %arg5[%c0_9, %c0_10] : memref<1x128xf32, #tpu.memory_space<vmem>>, vector<1x128xf32>
    %12 = vector.broadcast %11 : vector<1x128xf32> to vector<32x128xf32>
    %13 = arith.addf %10, %12 : vector<32x128xf32>
    %cst_11 = arith.constant 0.000000e+00 : f32
    %14 = vector.broadcast %cst_11 : f32 to vector<32x128xf32>
    %15 = arith.maximumf %13, %14 : vector<32x128xf32>
    %16 = arith.truncf %15 : vector<32x128xf32> to vector<32x128xbf16>
    %c0_12 = arith.constant 0 : index
    %c0_13 = arith.constant 0 : index
    %17 = vector.load %arg6[%c0_12, %c0_13] : memref<128x128xbf16, #tpu.memory_space<vmem>>, vector<128x128xbf16>
    %cst_14 = arith.constant dense<0.000000e+00> : vector<32x128xf32>
    %18 = tpu.matmul %16, %17, %cst_14 {dimension_numbers = #tpu.dot_dimension_numbers<[1], [0], [0], [1], [0, 0, 1, 1], [], []>} : vector<32x128xbf16>, vector<128x128xbf16>, vector<32x128xf32> -> vector<32x128xf32>
    %c0_15 = arith.constant 0 : index
    %c0_16 = arith.constant 0 : index
    %19 = vector.load %arg7[%c0_15, %c0_16] : memref<1x128xf32, #tpu.memory_space<vmem>>, vector<1x128xf32>
    %20 = vector.broadcast %19 : vector<1x128xf32> to vector<32x128xf32>
    %21 = arith.addf %18, %20 : vector<32x128xf32>
    %cst_17 = arith.constant 0.000000e+00 : f32
    %22 = vector.broadcast %cst_17 : f32 to vector<32x128xf32>
    %23 = arith.maximumf %21, %22 : vector<32x128xf32>
    %24 = arith.truncf %23 : vector<32x128xf32> to vector<32x128xbf16>
    %c0_18 = arith.constant 0 : index
    %c0_19 = arith.constant 0 : index
    %25 = vector.load %arg8[%c0_18, %c0_19] : memref<128x128xbf16, #tpu.memory_space<vmem>>, vector<128x128xbf16>
    %cst_20 = arith.constant dense<0.000000e+00> : vector<32x128xf32>
    %26 = tpu.matmul %24, %25, %cst_20 {dimension_numbers = #tpu.dot_dimension_numbers<[1], [0], [0], [1], [0, 0, 1, 1], [], []>} : vector<32x128xbf16>, vector<128x128xbf16>, vector<32x128xf32> -> vector<32x128xf32>
    %c0_21 = arith.constant 0 : index
    %c0_22 = arith.constant 0 : index
    %27 = vector.load %arg9[%c0_21, %c0_22] : memref<1x128xf32, #tpu.memory_space<vmem>>, vector<1x128xf32>
    %28 = vector.broadcast %27 : vector<1x128xf32> to vector<32x128xf32>
    %29 = arith.addf %26, %28 : vector<32x128xf32>
    %c0_23 = arith.constant 0 : index
    %c0_24 = arith.constant 0 : index
    %30 = vector.load %arg10[%c0_23, %c0_24] : memref<32x128xf32, #tpu.memory_space<vmem>>, vector<32x128xf32>
    tpu.vector_store %arg10[%c0_23, %c0_24], %29 {strides = array<i32>} : memref<32x128xf32, #tpu.memory_space<vmem>>, vector<32x128xf32>,
    return
  }
  func.func @transform_0(%arg0: i32) -> (i32, i32) {
    %c0_i32 = arith.constant 0 : i32
    %c0_i32_0 = arith.constant 0 : i32
    return %arg0, %c0_i32 : i32, i32
  }
  func.func @transform_1(%arg0: i32) -> (i32, i32) {
    %c0_i32 = arith.constant 0 : i32
    %c0_i32_0 = arith.constant 0 : i32
    %c0_i32_1 = arith.constant 0 : i32
    return %c0_i32, %c0_i32_0 : i32, i32
  }
  func.func @transform_2(%arg0: i32) -> (i32, i32) {
    %c0_i32 = arith.constant 0 : i32
    %c0_i32_0 = arith.constant 0 : i32
    %c0_i32_1 = arith.constant 0 : i32
    return %c0_i32, %c0_i32_0 : i32, i32
  }
  func.func @transform_3(%arg0: i32) -> (i32, i32) {
    %c0_i32 = arith.constant 0 : i32
    %c0_i32_0 = arith.constant 0 : i32
    %c0_i32_1 = arith.constant 0 : i32
    return %c0_i32, %c0_i32_0 : i32, i32
  }
  func.func @transform_4(%arg0: i32) -> (i32, i32) {
    %c0_i32 = arith.constant 0 : i32
    %c0_i32_0 = arith.constant 0 : i32
    %c0_i32_1 = arith.constant 0 : i32
    return %c0_i32, %c0_i32_0 : i32, i32
  }
  func.func @transform_5(%arg0: i32) -> (i32, i32) {
    %c0_i32 = arith.constant 0 : i32
    %c0_i32_0 = arith.constant 0 : i32
    %c0_i32_1 = arith.constant 0 : i32
    return %c0_i32, %c0_i32_0 : i32, i32
  }
  func.func @transform_6(%arg0: i32) -> (i32, i32) {
    %c0_i32 = arith.constant 0 : i32
    %c0_i32_0 = arith.constant 0 : i32
    %c0_i32_1 = arith.constant 0 : i32
    return %c0_i32, %c0_i32_0 : i32, i32
  }
  func.func @transform_7(%arg0: i32) -> (i32, i32) {
    %c0_i32 = arith.constant 0 : i32
    %c0_i32_0 = arith.constant 0 : i32
    %c0_i32_1 = arith.constant 0 : i32
    return %c0_i32, %c0_i32_0 : i32, i32
  }
  func.func @transform_8(%arg0: i32) -> (i32, i32) {
    %c0_i32 = arith.constant 0 : i32
    %c0_i32_0 = arith.constant 0 : i32
    %c0_i32_1 = arith.constant 0 : i32
    return %c0_i32, %c0_i32_0 : i32, i32
  }
  func.func @transform_9(%arg0: i32) -> (i32, i32) {
    %c0_i32 = arith.constant 0 : i32
    %c0_i32_0 = arith.constant 0 : i32
    return %arg0, %c0_i32 : i32, i32
  }
}

</mosaic_0001>

<llo_original>
// kernel: tpu_custom_call.1
$region0: #{tpu_custom_call.1}
  #allocation0 [shape = 'u32[]', space=smem, size = 0x4, offset = 0x4, fixed_abs, tag = 'smem constant byte address 0x4 - core index']
  #allocation1 [shape = 'u32[72,128]{1,0:T(1,128)}', space=vmem, size = 0x9000, scoped, tag = 'internal scratch']
  %s0 = inlined_call_operand.hbm [shape: bf16[32,128], index: 0, kind: input, shape index: {}]
  %s1 = inlined_call_operand.hbm [shape: bf16[128,128], index: 1, kind: input, shape index: {}]
  %s2 = inlined_call_operand.vmem [shape: f32[1,128], index: 2, kind: input, shape index: {}]
  %s3 = inlined_call_operand.hbm [shape: bf16[128,128], index: 3, kind: input, shape index: {}]
  %s4 = inlined_call_operand.vmem [shape: f32[1,128], index: 4, kind: input, shape index: {}]
  %s5 = inlined_call_operand.hbm [shape: bf16[128,128], index: 5, kind: input, shape index: {}]
  %s6 = inlined_call_operand.vmem [shape: f32[1,128], index: 6, kind: input, shape index: {}]
  %s7 = inlined_call_operand.hbm [shape: bf16[128,128], index: 7, kind: input, shape index: {}]
  %s8 = inlined_call_operand.vmem [shape: f32[1,128], index: 8, kind: input, shape index: {}]
  %s9 = inlined_call_operand.hbm [shape: f32[32,128], index: 9, kind: output, shape index: {}]
  %s10 = sld [smem:[#allocation0]]
  $region66: #{tpu_custom_call.1} parent=0
    _
  %s12 = ssub.s32 1, %s10
  %s13 = scalar_select 0, %s12, %s10
  $region1: #{tpu_custom_call.1} parent=0
    #allocation2 [shape = 'u8[8192]{0}', space=vmem, size = 0x2000, scoped, tag = 'input window, operand 0, single buffered']
    #allocation3 [shape = 's32[1]{0}', space=sflag, size = 0x4, scoped, tag = 'scoped memory for tpu_custom_call.1']
    #allocation4 [shape = 's32[1]{0}', space=sflag, size = 0x4, scoped, tag = 'scoped memory for tpu_custom_call.1']
    #allocation5 [shape = 'u8[32768]{0}', space=vmem, size = 0x8000, scoped, tag = 'input window, operand 1, single buffered']
    #allocation6 [shape = 's32[1]{0}', space=sflag, size = 0x4, scoped, tag = 'scoped memory for tpu_custom_call.1']
    #allocation7 [shape = 'u8[32768]{0}', space=vmem, size = 0x8000, scoped, tag = 'input window, operand 3, single buffered']
    #allocation8 [shape = 'u8[32768]{0}', space=vmem, size = 0x8000, scoped, tag = 'input window, operand 5, single buffered']
    #allocation9 [shape = 's32[1]{0}', space=sflag, size = 0x4, scoped, tag = 'scoped memory for tpu_custom_call.1']
    #allocation10 [shape = 'u8[32768]{0}', space=vmem, size = 0x8000, scoped, tag = 'input window, operand 7, single buffered']
    #allocation11 [shape = 'u8[16384]{0}', space=vmem, size = 0x4000, scoped, tag = 'output window, operand 0, single buffered']
    %14 = vsyncpa [#allocation3], 0
    %15 = vsyncpa [#allocation6], 0
    %16 = vsyncpa [#allocation9], 0
    %17 = vsyncpa [#allocation4], 0
    // Predicated region
    $region2: #{tpu_custom_call.1} parent=1 // pred_check
      _
    $region3: #{tpu_custom_call.1} parent=1 // pred_check_branch
      %19 = sbr.rel (0) target = $region5
    $region4: #{tpu_custom_call.1} parent=1 // pred_region
      %21 = vsyncadd [#allocation3], 0
      %s22 = sshll.u32 %s0, 4
      %s23 = int_to_ptr.hbm [resolvable:$true] %s22
      %s24 = sshll.u32 [#allocation2], 4
      %s25 = int_to_ptr.vmem [resolvable:$true] %s24
      %30 = dma.hbm_to_vmem [thread:$0]  %s23, 256, %s25, [#allocation3], 64, 64, 4
    $region5: #{tpu_custom_call.1} parent=1 // pred_fallthru
      _
    // Predicated region
    $region6: #{tpu_custom_call.1} parent=1 // pred_check
      _
    $region7: #{tpu_custom_call.1} parent=1 // pred_check_branch
      %32 = sbr.rel (0) target = $region9
    $region8: #{tpu_custom_call.1} parent=1 // pred_region
      %34 = vsyncadd [#allocation6], 0
      %s35 = sshll.u32 %s1, 4
      %s36 = int_to_ptr.hbm [resolvable:$true] %s35
      %s37 = sshll.u32 [#allocation5], 4
      %s38 = int_to_ptr.vmem [resolvable:$true] %s37
      %43 = dma.hbm_to_vmem [thread:$0]  %s36, 1024, %s38, [#allocation6], 64, 64, 4
    $region9: #{tpu_custom_call.1} parent=1 // pred_fallthru
      _
    // Predicated region
    $region10: #{tpu_custom_call.1} parent=1 // pred_check
      _
    $region11: #{tpu_custom_call.1} parent=1 // pred_check_branch
      %45 = sbr.rel (0) target = $region13
    $region12: #{tpu_custom_call.1} parent=1 // pred_region
      _
    $region13: #{tpu_custom_call.1} parent=1 // pred_fallthru
      _
    // Predicated region
    $region14: #{tpu_custom_call.1} parent=1 // pred_check
      _
    $region15: #{tpu_custom_call.1} parent=1 // pred_check_branch
      %47 = sbr.rel (0) target = $region17
    $region16: #{tpu_custom_call.1} parent=1 // pred_region
      %49 = vsyncadd [#allocation6], 0
      %s50 = sshll.u32 %s3, 4
      %s51 = int_to_ptr.hbm [resolvable:$true] %s50
      %s52 = sshll.u32 [#allocation7], 4
      %s53 = int_to_ptr.vmem [resolvable:$true] %s52
      %58 = dma.hbm_to_vmem [thread:$0]  %s51, 1024, %s53, [#allocation6], 64, 64, 4
    $region17: #{tpu_custom_call.1} parent=1 // pred_fallthru
      _
    // Predicated region
    $region18: #{tpu_custom_call.1} parent=1 // pred_check
      _
    $region19: #{tpu_custom_call.1} parent=1 // pred_check_branch
      %60 = sbr.rel (0) target = $region21
    $region20: #{tpu_custom_call.1} parent=1 // pred_region
      _
    $region21: #{tpu_custom_call.1} parent=1 // pred_fallthru
      _
    // Predicated region
    $region22: #{tpu_custom_call.1} parent=1 // pred_check
      _
    $region23: #{tpu_custom_call.1} parent=1 // pred_check_branch
      %62 = sbr.rel (0) target = $region25
    $region24: #{tpu_custom_call.1} parent=1 // pred_region
      %64 = vsyncadd [#allocation9], 0
      %s65 = sshll.u32 %s5, 4
      %s66 = int_to_ptr.hbm [resolvable:$true] %s65
      %s67 = sshll.u32 [#allocation8], 4
      %s68 = int_to_ptr.vmem [resolvable:$true] %s67
      %73 = dma.hbm_to_vmem [thread:$0]  %s66, 1024, %s68, [#allocation9], 64, 64, 4
    $region25: #{tpu_custom_call.1} parent=1 // pred_fallthru
      _
    // Predicated region
    $region26: #{tpu_custom_call.1} parent=1 // pred_check
      _
    $region27: #{tpu_custom_call.1} parent=1 // pred_check_branch
      %75 = sbr.rel (0) target = $region29
    $region28: #{tpu_custom_call.1} parent=1 // pred_region
      _
    $region29: #{tpu_custom_call.1} parent=1 // pred_fallthru
      _
    // Predicated region
    $region30: #{tpu_custom_call.1} parent=1 // pred_check
      _
    $region31: #{tpu_custom_call.1} parent=1 // pred_check_branch
      %77 = sbr.rel (0) target = $region33
    $region32: #{tpu_custom_call.1} parent=1 // pred_region
      %79 = vsyncadd [#allocation9], 0
      %s80 = sshll.u32 %s7, 4
      %s81 = int_to_ptr.hbm [resolvable:$true] %s80
      %s82 = sshll.u32 [#allocation10], 4
      %s83 = int_to_ptr.vmem [resolvable:$true] %s82
      %88 = dma.hbm_to_vmem [thread:$0]  %s81, 1024, %s83, [#allocation9], 64, 64, 4
    $region33: #{tpu_custom_call.1} parent=1 // pred_fallthru
      _
    // Predicated region
    $region34: #{tpu_custom_call.1} parent=1 // pred_check
      _
    $region35: #{tpu_custom_call.1} parent=1 // pred_check_branch
      %90 = sbr.rel (0) target = $region37
    $region36: #{tpu_custom_call.1} parent=1 // pred_region
      _
    $region37: #{tpu_custom_call.1} parent=1 // pred_fallthru
      _
    // Predicated region
    $region38: #{tpu_custom_call.1} parent=1 // pred_check
      _
    $region39: #{tpu_custom_call.1} parent=1 // pred_check_branch
      %92 = sbr.rel (0) target = $region41
    $region40: #{tpu_custom_call.1} parent=1 // pred_region
      %94 = dma.done [#allocation3], 256
    $region41: #{tpu_custom_call.1} parent=1 // pred_fallthru
      _
    // Predicated region
    $region42: #{tpu_custom_call.1} parent=1 // pred_check
      _
    $region43: #{tpu_custom_call.1} parent=1 // pred_check_branch
      %96 = sbr.rel (0) target = $region45
    $region44: #{tpu_custom_call.1} parent=1 // pred_region
      %98 = dma.done [#allocation6], 1024
    $region45: #{tpu_custom_call.1} parent=1 // pred_fallthru
      _
    // Predicated region
    $region46: #{tpu_custom_call.1} parent=1 // pred_check
      _
    $region47: #{tpu_custom_call.1} parent=1 // pred_check_branch
      %100 = sbr.rel (0) target = $region49
    $region48: #{tpu_custom_call.1} parent=1 // pred_region
      %102 = dma.done [#allocation6], 1024
    $region49: #{tpu_custom_call.1} parent=1 // pred_fallthru
      _
    // Predicated region
    $region50: #{tpu_custom_call.1} parent=1 // pred_check
      _
    $region51: #{tpu_custom_call.1} parent=1 // pred_check_branch
      %104 = sbr.rel (0) target = $region53
    $region52: #{tpu_custom_call.1} parent=1 // pred_region
      %106 = dma.done [#allocation9], 1024
    $region53: #{tpu_custom_call.1} parent=1 // pred_fallthru
      _
    // Predicated region
    $region54: #{tpu_custom_call.1} parent=1 // pred_check
      _
    $region55: #{tpu_custom_call.1} parent=1 // pred_check_branch
      %108 = sbr.rel (0) target = $region57
    $region56: #{tpu_custom_call.1} parent=1 // pred_region
      %110 = dma.done [#allocation9], 1024
    $region57: #{tpu_custom_call.1} parent=1 // pred_fallthru
      _
    %v111 = vld [vmem:[#allocation2] sm:$0xf]
    %v112 = vld [vmem:[#allocation2 + $0x4] sm:$0xf]
    %v113 = vld [vmem:[#allocation2 + $0x8] sm:$0xf]
    %v114 = vld [vmem:[#allocation2 + $0xc] sm:$0xf]
    %v115 = vld [vmem:[#allocation5] sm:$0xf]
    %v116 = vld [vmem:[#allocation5 + $0x4] sm:$0xf]
    %v117 = vld [vmem:[#allocation5 + $0x8] sm:$0xf]
    %v118 = vld [vmem:[#allocation5 + $0xc] sm:$0xf]
    %v119 = vld [vmem:[#allocation5 + $0x10] sm:$0xf]
    %v120 = vld [vmem:[#allocation5 + $0x14] sm:$0xf]
    %v121 = vld [vmem:[#allocation5 + $0x18] sm:$0xf]
    %v122 = vld [vmem:[#allocation5 + $0x1c] sm:$0xf]
    %v123 = vld [vmem:[#allocation5 + $0x20] sm:$0xf]
    %v124 = vld [vmem:[#allocation5 + $0x24] sm:$0xf]
    %v125 = vld [vmem:[#allocation5 + $0x28] sm:$0xf]
    %v126 = vld [vmem:[#allocation5 + $0x2c] sm:$0xf]
    %v127 = vld [vmem:[#allocation5 + $0x30] sm:$0xf]
    %v128 = vld [vmem:[#allocation5 + $0x34] sm:$0xf]
    %v129 = vld [vmem:[#allocation5 + $0x38] sm:$0xf]
    %v130 = vld [vmem:[#allocation5 + $0x3c] sm:$0xf]
    %v131 = vld [vmem:[%s2] sm:$0x1]
    %v133 = vperm.slane %v131, 0
    %v139 = vunpack.c.l.b16 %v111
    %v140 = vunpack.c.l.b16 %v112
    %v141 = vunpack.c.l.b16 %v113
    %v142 = vunpack.c.l.b16 %v114
    %v143 = vpack.c.b16 %v140, %v139
    %v144 = vpack.c.b16 %v142, %v141
    %v163 = vunpack.c.l.b16 %v115
    %v164 = vunpack.c.l.b16 %v116
    %v165 = vunpack.c.l.b16 %v117
    %v166 = vunpack.c.l.b16 %v118
    %v167 = vunpack.c.l.b16 %v119
    %v168 = vunpack.c.l.b16 %v120
    %v169 = vunpack.c.l.b16 %v121
    %v170 = vunpack.c.l.b16 %v122
    %v171 = vunpack.c.l.b16 %v123
    %v172 = vunpack.c.l.b16 %v124
    %v173 = vunpack.c.l.b16 %v125
    %v174 = vunpack.c.l.b16 %v126
    %v175 = vunpack.c.l.b16 %v127
    %v176 = vunpack.c.l.b16 %v128
    %v177 = vunpack.c.l.b16 %v129
    %v178 = vunpack.c.l.b16 %v130
    %v179 = vpack.c.b16 %v164, %v163
    %v180 = vpack.c.b16 %v166, %v165
    %v181 = vpack.c.b16 %v168, %v167
    %v182 = vpack.c.b16 %v170, %v169
    %v183 = vpack.c.b16 %v172, %v171
    %v184 = vpack.c.b16 %v174, %v173
    %v185 = vpack.c.b16 %v176, %v175
    %v186 = vpack.c.b16 %v178, %v177
    %195 = vmatpush.bf16.msra.mxu0 %v186
    %196 = vmatpush.bf16.msra.mxu0 %v185
    %197 = vmatpush.bf16.msra.mxu0 %v184
    %198 = vmatpush.bf16.msra.mxu0 %v183
    %199 = vmatpush.bf16.msra.mxu0 %v182
    %200 = vmatpush.bf16.msra.mxu0 %v181
    %201 = vmatpush.bf16.msra.mxu0 %v180
    %202 = vmatpush.bf16.msra.mxu0 %v179
    %203 = vmatmul.bf16.gmra.mxu0 %v143
    %v204 = vpop.f32.mrf.mxu0
    %v205 = vadd.f32 %v133, %v204
    %v206 = vpop.f32.mrf.mxu0
    %v207 = vadd.f32 %v133, %v206
    %208 = vmatmul.bf16.gmra.mxu0 %v144
    %v209 = vpop.f32.mrf.mxu0
    %v210 = vadd.f32 %v133, %v209
    %v211 = vpop.f32.mrf.mxu0
    %v212 = vadd.f32 %v133, %v211
    %213 = vdwg.mxu0
    %v214 = vmax.f32 %v205, 0.0
    %v215 = vmax.f32 %v207, 0.0
    %v216 = vmax.f32 %v210, 0.0
    %v217 = vmax.f32 %v212, 0.0
    %v218 = vpack.c.bf16 %v215, %v214
    %v219 = vpack.c.bf16 %v217, %v216
    %v220 = vld [vmem:[#allocation7] sm:$0xf]
    %v221 = vld [vmem:[#allocation7 + $0x4] sm:$0xf]
    %v222 = vld [vmem:[#allocation7 + $0x8] sm:$0xf]
    %v223 = vld [vmem:[#allocation7 + $0xc] sm:$0xf]
    %v224 = vld [vmem:[#allocation7 + $0x10] sm:$0xf]
    %v225 = vld [vmem:[#allocation7 + $0x14] sm:$0xf]
    %v226 = vld [vmem:[#allocation7 + $0x18] sm:$0xf]
    %v227 = vld [vmem:[#allocation7 + $0x1c] sm:$0xf]
    %v228 = vld [vmem:[#allocation7 + $0x20] sm:$0xf]
    %v229 = vld [vmem:[#allocation7 + $0x24] sm:$0xf]
    %v230 = vld [vmem:[#allocation7 + $0x28] sm:$0xf]
    %v231 = vld [vmem:[#allocation7 + $0x2c] sm:$0xf]
    %v232 = vld [vmem:[#allocation7 + $0x30] sm:$0xf]
    %v233 = vld [vmem:[#allocation7 + $0x34] sm:$0xf]
    %v234 = vld [vmem:[#allocation7 + $0x38] sm:$0xf]
    %v235 = vld [vmem:[#allocation7 + $0x3c] sm:$0xf]
    %v236 = vld [vmem:[%s4] sm:$0x1]
    %v238 = vperm.slane %v236, 0
    %v256 = vunpack.c.l.b16 %v220
    %v257 = vunpack.c.l.b16 %v221
    %v258 = vunpack.c.l.b16 %v222
    %v259 = vunpack.c.l.b16 %v223
    %v260 = vunpack.c.l.b16 %v224
    %v261 = vunpack.c.l.b16 %v225
    %v262 = vunpack.c.l.b16 %v226
    %v263 = vunpack.c.l.b16 %v227
    %v264 = vunpack.c.l.b16 %v228
    %v265 = vunpack.c.l.b16 %v229
    %v266 = vunpack.c.l.b16 %v230
    %v267 = vunpack.c.l.b16 %v231
    %v268 = vunpack.c.l.b16 %v232
    %v269 = vunpack.c.l.b16 %v233
    %v270 = vunpack.c.l.b16 %v234
    %v271 = vunpack.c.l.b16 %v235
    %v272 = vpack.c.b16 %v257, %v256
    %v273 = vpack.c.b16 %v259, %v258
    %v274 = vpack.c.b16 %v261, %v260
    %v275 = vpack.c.b16 %v263, %v262
    %v276 = vpack.c.b16 %v265, %v264
    %v277 = vpack.c.b16 %v267, %v266
    %v278 = vpack.c.b16 %v269, %v268
    %v279 = vpack.c.b16 %v271, %v270
    %288 = vmatpush.bf16.msra.mxu0 %v279
    %289 = vmatpush.bf16.msra.mxu0 %v278
    %290 = vmatpush.bf16.msra.mxu0 %v277
    %291 = vmatpush.bf16.msra.mxu0 %v276
    %292 = vmatpush.bf16.msra.mxu0 %v275
    %293 = vmatpush.bf16.msra.mxu0 %v274
    %294 = vmatpush.bf16.msra.mxu0 %v273
    %295 = vmatpush.bf16.msra.mxu0 %v272
    %296 = vmatmul.bf16.gmra.mxu0 %v218
    %v297 = vpop.f32.mrf.mxu0
    %v298 = vadd.f32 %v238, %v297
    %v299 = vpop.f32.mrf.mxu0
    %v300 = vadd.f32 %v238, %v299
    %301 = vmatmul.bf16.gmra.mxu0 %v219
    %v302 = vpop.f32.mrf.mxu0
    %v303 = vadd.f32 %v238, %v302
    %v304 = vpop.f32.mrf.mxu0
    %v305 = vadd.f32 %v238, %v304
    %306 = vdwg.mxu0
    %v307 = vmax.f32 %v298, 0.0
    %v308 = vmax.f32 %v300, 0.0
    %v309 = vmax.f32 %v303, 0.0
    %v310 = vmax.f32 %v305, 0.0
    %v311 = vpack.c.bf16 %v308, %v307
    %v312 = vpack.c.bf16 %v310, %v309
    %v313 = vld [vmem:[#allocation8] sm:$0xf]
    %v314 = vld [vmem:[#allocation8 + $0x4] sm:$0xf]
    %v315 = vld [vmem:[#allocation8 + $0x8] sm:$0xf]
    %v316 = vld [vmem:[#allocation8 + $0xc] sm:$0xf]
    %v317 = vld [vmem:[#allocation8 + $0x10] sm:$0xf]
    %v318 = vld [vmem:[#allocation8 + $0x14] sm:$0xf]
    %v319 = vld [vmem:[#allocation8 + $0x18] sm:$0xf]
    %v320 = vld [vmem:[#allocation8 + $0x1c] sm:$0xf]
    %v321 = vld [vmem:[#allocation8 + $0x20] sm:$0xf]
    %v322 = vld [vmem:[#allocation8 + $0x24] sm:$0xf]
    %v323 = vld [vmem:[#allocation8 + $0x28] sm:$0xf]
    %v324 = vld [vmem:[#allocation8 + $0x2c] sm:$0xf]
    %v325 = vld [vmem:[#allocation8 + $0x30] sm:$0xf]
    %v326 = vld [vmem:[#allocation8 + $0x34] sm:$0xf]
    %v327 = vld [vmem:[#allocation8 + $0x38] sm:$0xf]
    %v328 = vld [vmem:[#allocation8 + $0x3c] sm:$0xf]
    %v329 = vld [vmem:[%s6] sm:$0x1]
    %v331 = vperm.slane %v329, 0
    %v349 = vunpack.c.l.b16 %v313
    %v350 = vunpack.c.l.b16 %v314
    %v351 = vunpack.c.l.b16 %v315
    %v352 = vunpack.c.l.b16 %v316
    %v353 = vunpack.c.l.b16 %v317
    %v354 = vunpack.c.l.b16 %v318
    %v355 = vunpack.c.l.b16 %v319
    %v356 = vunpack.c.l.b16 %v320
    %v357 = vunpack.c.l.b16 %v321
    %v358 = vunpack.c.l.b16 %v322
    %v359 = vunpack.c.l.b16 %v323
    %v360 = vunpack.c.l.b16 %v324
    %v361 = vunpack.c.l.b16 %v325
    %v362 = vunpack.c.l.b16 %v326
    %v363 = vunpack.c.l.b16 %v327
    %v364 = vunpack.c.l.b16 %v328
    %v365 = vpack.c.b16 %v350, %v349
    %v366 = vpack.c.b16 %v352, %v351
    %v367 = vpack.c.b16 %v354, %v353
    %v368 = vpack.c.b16 %v356, %v355
    %v369 = vpack.c.b16 %v358, %v357
    %v370 = vpack.c.b16 %v360, %v359
    %v371 = vpack.c.b16 %v362, %v361
    %v372 = vpack.c.b16 %v364, %v363
    %381 = vmatpush.bf16.msra.mxu0 %v372
    %382 = vmatpush.bf16.msra.mxu0 %v371
    %383 = vmatpush.bf16.msra.mxu0 %v370
    %384 = vmatpush.bf16.msra.mxu0 %v369
    %385 = vmatpush.bf16.msra.mxu0 %v368
    %386 = vmatpush.bf16.msra.mxu0 %v367
    %387 = vmatpush.bf16.msra.mxu0 %v366
    %388 = vmatpush.bf16.msra.mxu0 %v365
    %389 = vmatmul.bf16.gmra.mxu0 %v311
    %v390 = vpop.f32.mrf.mxu0
    %v391 = vadd.f32 %v331, %v390
    %v392 = vpop.f32.mrf.mxu0
    %v393 = vadd.f32 %v331, %v392
    %394 = vmatmul.bf16.gmra.mxu0 %v312
    %v395 = vpop.f32.mrf.mxu0
    %v396 = vadd.f32 %v331, %v395
    %v397 = vpop.f32.mrf.mxu0
    %v398 = vadd.f32 %v331, %v397
    %399 = vdwg.mxu0
    %v400 = vmax.f32 %v391, 0.0
    %v401 = vmax.f32 %v393, 0.0
    %v402 = vmax.f32 %v396, 0.0
    %v403 = vmax.f32 %v398, 0.0
    %v404 = vpack.c.bf16 %v401, %v400
    %v405 = vpack.c.bf16 %v403, %v402
    %v406 = vld [vmem:[#allocation10] sm:$0xf]
    %v407 = vld [vmem:[#allocation10 + $0x4] sm:$0xf]
    %v408 = vld [vmem:[#allocation10 + $0x8] sm:$0xf]
    %v409 = vld [vmem:[#allocation10 + $0xc] sm:$0xf]
    %v410 = vld [vmem:[#allocation10 + $0x10] sm:$0xf]
    %v411 = vld [vmem:[#allocation10 + $0x14] sm:$0xf]
    %v412 = vld [vmem:[#allocation10 + $0x18] sm:$0xf]
    %v413 = vld [vmem:[#allocation10 + $0x1c] sm:$0xf]
    %v414 = vld [vmem:[#allocation10 + $0x20] sm:$0xf]
    %v415 = vld [vmem:[#allocation10 + $0x24] sm:$0xf]
    %v416 = vld [vmem:[#allocation10 + $0x28] sm:$0xf]
    %v417 = vld [vmem:[#allocation10 + $0x2c] sm:$0xf]
    %v418 = vld [vmem:[#allocation10 + $0x30] sm:$0xf]
    %v419 = vld [vmem:[#allocation10 + $0x34] sm:$0xf]
    %v420 = vld [vmem:[#allocation10 + $0x38] sm:$0xf]
    %v421 = vld [vmem:[#allocation10 + $0x3c] sm:$0xf]
    %v422 = vld [vmem:[%s8] sm:$0x1]
    %v424 = vperm.slane %v422, 0
    %v442 = vunpack.c.l.b16 %v406
    %v443 = vunpack.c.l.b16 %v407
    %v444 = vunpack.c.l.b16 %v408
    %v445 = vunpack.c.l.b16 %v409
    %v446 = vunpack.c.l.b16 %v410
    %v447 = vunpack.c.l.b16 %v411
    %v448 = vunpack.c.l.b16 %v412
    %v449 = vunpack.c.l.b16 %v413
    %v450 = vunpack.c.l.b16 %v414
    %v451 = vunpack.c.l.b16 %v415
    %v452 = vunpack.c.l.b16 %v416
    %v453 = vunpack.c.l.b16 %v417
    %v454 = vunpack.c.l.b16 %v418
    %v455 = vunpack.c.l.b16 %v419
    %v456 = vunpack.c.l.b16 %v420
    %v457 = vunpack.c.l.b16 %v421
    %v458 = vpack.c.b16 %v443, %v442
    %v459 = vpack.c.b16 %v445, %v444
    %v460 = vpack.c.b16 %v447, %v446
    %v461 = vpack.c.b16 %v449, %v448
    %v462 = vpack.c.b16 %v451, %v450
    %v463 = vpack.c.b16 %v453, %v452
    %v464 = vpack.c.b16 %v455, %v454
    %v465 = vpack.c.b16 %v457, %v456
    %474 = vmatpush.bf16.msra.mxu0 %v465
    %475 = vmatpush.bf16.msra.mxu0 %v464
    %476 = vmatpush.bf16.msra.mxu0 %v463
    %477 = vmatpush.bf16.msra.mxu0 %v462
    %478 = vmatpush.bf16.msra.mxu0 %v461
    %479 = vmatpush.bf16.msra.mxu0 %v460
    %480 = vmatpush.bf16.msra.mxu0 %v459
    %481 = vmatpush.bf16.msra.mxu0 %v458
    %482 = vmatmul.bf16.gmra.mxu0 %v404
    %v483 = vpop.f32.mrf.mxu0
    %v484 = vadd.f32 %v424, %v483
    %v485 = vpop.f32.mrf.mxu0
    %v486 = vadd.f32 %v424, %v485
    %487 = vmatmul.bf16.gmra.mxu0 %v405
    %v488 = vpop.f32.mrf.mxu0
    %v489 = vadd.f32 %v424, %v488
    %v490 = vpop.f32.mrf.mxu0
    %v491 = vadd.f32 %v424, %v490
    %492 = vdwg.mxu0
    %493 = vst [vmem:[#allocation11] sm:$0xff] %v484
    %494 = vst [vmem:[#allocation11 + $0x8] sm:$0xff] %v486
    %495 = vst [vmem:[#allocation11 + $0x10] sm:$0xff] %v489
    %496 = vst [vmem:[#allocation11 + $0x18] sm:$0xff] %v491
    // Predicated region
    $region58: #{tpu_custom_call.1} parent=1 // pred_check
      _
    $region59: #{tpu_custom_call.1} parent=1 // pred_check_branch
      %498 = sbr.rel (0) target = $region61
    $region60: #{tpu_custom_call.1} parent=1 // pred_region
      %500 = vsyncadd [#allocation4], 0
      %s501 = sshll.u32 [#allocation11], 4
      %s502 = int_to_ptr.vmem [resolvable:$true] %s501
      %s503 = sshll.u32 %s9, 4
      %s504 = int_to_ptr.hbm [resolvable:$true] %s503
      %509 = dma.vmem_to_hbm [thread:$0]  %s502, 512, %s504, [#allocation4], 128, 128, 8
    $region61: #{tpu_custom_call.1} parent=1 // pred_fallthru
      _
    // Predicated region
    $region62: #{tpu_custom_call.1} parent=1 // pred_check
      _
    $region63: #{tpu_custom_call.1} parent=1 // pred_check_branch
      %511 = sbr.rel (0) target = $region65
    $region64: #{tpu_custom_call.1} parent=1 // pred_region
      %513 = dma.done [#allocation4], 512
    $region65: #{tpu_custom_call.1} parent=1 // pred_fallthru
      _
    %514 = vsyncpa [#allocation3], 1
    %515 = vsyncpa [#allocation6], 1
    %516 = vsyncpa [#allocation9], 1
    %517 = vsyncpa [#allocation4], 1

</llo_original>
